<compile_context>
chip_gen: v7x
topology: tpu7x:2x2x1
jax: 0.10.0
libtpu: 0.0.40
codegen_flags: <defaults>
</compile_context>

<pallas_src>
import functools

import jax
import jax.numpy as jnp
from jax.experimental import pallas as pl
from jax.experimental.pallas import tpu as pltpu


# ----------------------------------------------------------------------------
# small helpers
# ----------------------------------------------------------------------------
def _round_up(x, m):
    return ((x + m - 1) // m) * m


def _pad_axis(x, axis, target):
    if x.shape[axis] == target:
        return x
    cfg = [(0, 0)] * x.ndim
    cfg[axis] = (0, target - x.shape[axis])
    return jnp.pad(x, cfg)


def _vmem_budget():
    """Generation-aware VMEM budget / limit (v5e/v6e: 128 MiB, v7x: 64 MiB/TC)."""
    cap = 64 * 1024 * 1024
    try:
        cap = int(pltpu.get_tpu_info().vmem_capacity_bytes)
    except Exception:
        pass
    budget = int(cap * 0.60)
    limit = min(int(cap * 0.85), 120 * 1024 * 1024)
    return budget, limit


def _choose_tile_m(m8, ho, row_bytes, fixed_bytes, tile_max, budget):
    """Largest multiple-of-8 M tile under the VMEM budget; prefer one that
    divides M (no output crop) and yields an even parallel-step count so v7x's
    two TensorCores stay balanced."""
    tile = min(tile_max, m8)
    while tile > 8 and fixed_bytes + tile * row_bytes > budget:
        tile = max(8, _round_up(tile // 2, 8))
    first_div = None
    for t in range(tile, max(8, tile // 2) - 1, -8):
        if m8 % t == 0:
            if ((m8 // t) * ho) % 2 == 0:
                return t
            if first_div is None:
                first_div = t
    return first_div if first_div is not None else tile


# ----------------------------------------------------------------------------
# Pallas kernels: per (m-tile, output-row) block, accumulate the 3 dy taps
#   acc += lhs_tap @ W[dy]      (bf16 MXU operands, f32 accumulation)
# then epilogue  relu(acc + bias [+ residual | + xs @ ws])  on the last tap.
# ----------------------------------------------------------------------------
def _tap_kernel(lhs_ref, rhs_ref, bias_ref, out_ref, acc_ref):
    d = pl.program_id(2)

    @pl.when(d == 0)
    def _():
        acc_ref[...] = jnp.zeros_like(acc_ref)

    acc_ref[...] += jnp.dot(lhs_ref[...], rhs_ref[d],
                            preferred_element_type=jnp.float32)

    @pl.when(d == pl.num_programs(2) - 1)
    def _():
        out_ref[...] = jnp.maximum(acc_ref[...] + bias_ref[...], 0.0
                                   ).astype(out_ref.dtype)


def _tap_kernel_res(lhs_ref, rhs_ref, bias_ref, res_ref, out_ref, acc_ref):
    d = pl.program_id(2)

    @pl.when(d == 0)
    def _():
        acc_ref[...] = jnp.zeros_like(acc_ref)

    acc_ref[...] += jnp.dot(lhs_ref[...], rhs_ref[d],
                            preferred_element_type=jnp.float32)

    @pl.when(d == pl.num_programs(2) - 1)
    def _():
        y = acc_ref[...] + bias_ref[...] + res_ref[...].astype(jnp.float32)
        out_ref[...] = jnp.maximum(y, 0.0).astype(out_ref.dtype)


def _tap_kernel_proj(lhs_ref, rhs_ref, bias_ref, xs_ref, ws_ref, out_ref, acc_ref):
    d = pl.program_id(2)

    @pl.when(d == 0)
    def _():
        acc_ref[...] = jnp.dot(xs_ref[...], ws_ref[...],
                               preferred_element_type=jnp.float32)

    acc_ref[...] += jnp.dot(lhs_ref[...], rhs_ref[d],
                            preferred_element_type=jnp.float32)

    @pl.when(d == pl.num_programs(2) - 1)
    def _():
        out_ref[...] = jnp.maximum(acc_ref[...] + bias_ref[...], 0.0
                                   ).astype(out_ref.dtype)


# ----------------------------------------------------------------------------
# fused 3x3-conv + folded BN + (optional shortcut) + ReLU via the tap grid
# ----------------------------------------------------------------------------
def _conv3x3_tap(cols, rhs3, bias, ho, stride, *, residual=None, proj=None,
                 out_dtype=jnp.float32):
    """out[h, m, :] = relu( sum_dy cols[h*stride+dy, m, :] @ rhs3[dy] + bias
                            [+ residual[h, m, :] | + xs[h, m, :] @ ws] )

    cols : (Hp, M, K3)  bf16  dx-direction im2col of the padded activation
    rhs3 : (3, K3, C)   bf16  per-dy weight slabs, BN scale folded in
    bias : (1, C)       f32   folded BN shift (shortcut shift already added)
    residual : (Ho, M, C) bf16       identity shortcut
    proj : (xs (Ho, M, Kp) bf16, ws (Kp, C) bf16)  1x1-conv shortcut
    Returns (Ho, M_pad, C) in out_dtype.
    """
    hp, m, k3 = cols.shape
    c = rhs3.shape[-1]
    out_bytes = jnp.dtype(out_dtype).itemsize
    budget, vmem_limit = _vmem_budget()
    tile_max = 1024 if budget > 48 * 1024 * 1024 else 512

    # VMEM estimate: per-M-row double-buffered streams + f32 accumulator,
    # plus resident (still double-buffered) weights/bias.
    row_bytes = 2 * 2 * k3 + 2 * out_bytes * c + 4 * c
    fixed_bytes = 2 * 2 * 3 * k3 * c + 2 * 4 * c
    if residual is not None:
        row_bytes += 2 * 2 * c
    if proj is not None:
        xs, ws = proj
        kp = xs.shape[-1]
        row_bytes += 2 * 2 * kp
        fixed_bytes += 2 * 2 * kp * c

    m8 = _round_up(m, 8)
    tm = _choose_tile_m(m8, ho, row_bytes, fixed_bytes, tile_max, budget)
    m_pad = _round_up(m8, tm)
    num_m = m_pad // tm

    cols = _pad_axis(cols, 1, m_pad)

    lhs_spec = pl.BlockSpec((None, tm, k3), lambda i, h, d: (h * stride + d, i, 0))
    rhs_spec = pl.BlockSpec((3, k3, c), lambda i, h, d: (0, 0, 0))
    bias_spec = pl.BlockSpec((1, c), lambda i, h, d: (0, 0))
    out_spec = pl.BlockSpec((None, tm, c), lambda i, h, d: (h, i, 0))

    in_specs = [lhs_spec, rhs_spec, bias_spec]
    args = [cols, rhs3, bias]
    if residual is not None:
        in_specs.append(pl.BlockSpec((None, tm, c), lambda i, h, d: (h, i, 0)))
        args.append(_pad_axis(residual, 1, m_pad))
        kernel = _tap_kernel_res
    elif proj is not None:
        in_specs += [pl.BlockSpec((None, tm, kp), lambda i, h, d: (h, i, 0)),
                     pl.BlockSpec((kp, c), lambda i, h, d: (0, 0))]
        args += [_pad_axis(xs, 1, m_pad), ws]
        kernel = _tap_kernel_proj
    else:
        kernel = _tap_kernel

    return pl.pallas_call(
        kernel,
        out_shape=jax.ShapeDtypeStruct((ho, m_pad, c), out_dtype),
        grid=(num_m, ho, 3),
        in_specs=in_specs,
        out_specs=out_spec,
        scratch_shapes=[pltpu.VMEM((tm, c), jnp.float32)],
        compiler_params=pltpu.CompilerParams(
            dimension_semantics=("parallel", "parallel", "arbitrary"),
            vmem_limit_bytes=vmem_limit),
    )(*args)


# ----------------------------------------------------------------------------
# plain-JAX glue: dx-im2col, weight reshape, BN folding
# ----------------------------------------------------------------------------
def _dx_im2col(xp, stride, wo):
    """xp: (Hp, N, Wp, C) zero-padded activation (spatial pad 1, channels padded).
    Returns (Hp, N*wo, 3*C): per padded row, the 3 dx taps concatenated."""
    hp, n, _, c = xp.shape
    cols = [xp[:, :, dx::stride, :][:, :, :wo, :] for dx in range(3)]
    return jnp.concatenate(cols, axis=-1).reshape(hp, n * wo, 3 * c)


def _w3x3_to_taps(w_oihw, scale, cin_pad, cout_pad):
    """(Cout, Cin, 3, 3) -> (3, 3*cin_pad, cout_pad), dy-major, (dx, cin) inner,
    BN scale folded into the output channels."""
    cout = w_oihw.shape[0]
    w = jnp.transpose(w_oihw, (2, 3, 1, 0)) * scale.reshape(1, 1, 1, cout)
    w = _pad_axis(_pad_axis(w, 2, cin_pad), 3, cout_pad)
    return w.reshape(3, 3 * cin_pad, cout_pad).astype(jnp.bfloat16)


def _fold_bn(gamma, beta, mean, var, eps=1e-5):
    scale = gamma / jnp.sqrt(var + eps)
    return scale, (beta - mean * scale).reshape(1, -1)


# ----------------------------------------------------------------------------
# BasicBlock parameters + forward
# ----------------------------------------------------------------------------
def init_basic_block_params(key, in_channels, out_channels, stride):
    ks = jax.random.split(key, 12)
    p = {
        "w1": 0.1 * jax.random.normal(ks[0], (out_channels, in_channels, 3, 3), jnp.float32),
        "bn1_g": 1.0 + 0.1 * jax.random.normal(ks[1], (out_channels,), jnp.float32),
        "bn1_b": 0.1 * jax.random.normal(ks[2], (out_channels,), jnp.float32),
        "bn1_m": 0.1 * jax.random.normal(ks[3], (out_channels,), jnp.float32),
        "bn1_v": 1.0 + 0.1 * jax.random.uniform(ks[4], (out_channels,), jnp.float32),
        "w2": 0.1 * jax.random.normal(ks[5], (out_channels, out_channels, 3, 3), jnp.float32),
        "bn2_g": 1.0 + 0.1 * jax.random.normal(ks[6], (out_channels,), jnp.float32),
        "bn2_b": 0.1 * jax.random.normal(ks[7], (out_channels,), jnp.float32),
        "bn2_m": 0.1 * jax.random.normal(ks[8], (out_channels,), jnp.float32),
        "bn2_v": 1.0 + 0.1 * jax.random.uniform(ks[9], (out_channels,), jnp.float32),
    }
    if stride != 1 or in_channels != out_channels:
        p["ws"] = 0.1 * jax.random.normal(ks[10], (out_channels, in_channels, 1, 1), jnp.float32)
        ks2 = jax.random.split(ks[11], 4)
        p["bns_g"] = 1.0 + 0.1 * jax.random.normal(ks2[0], (out_channels,), jnp.float32)
        p["bns_b"] = 0.1 * jax.random.normal(ks2[1], (out_channels,), jnp.float32)
        p["bns_m"] = 0.1 * jax.random.normal(ks2[2], (out_channels,), jnp.float32)
        p["bns_v"] = 1.0 + 0.1 * jax.random.uniform(ks2[3], (out_channels,), jnp.float32)
    return p


@functools.partial(jax.jit, static_argnames=("stride",))
def basic_block_forward(x_nchw, params, stride):
    n, cin, h, w = x_nchw.shape
    cout = params["w1"].shape[0]
    ho = (h - 1) // stride + 1
    wo = (w - 1) // stride + 1
    m = n * wo
    cin_p = _round_up(cin, 8)        # per-dx-tap contraction width (full-dim block)
    cout_p = _round_up(cout, 128)    # lane-dense output channels

    # NCHW -> (H, N, W, C): H leading so a dy tap is one block-index shift.
    x_t = _pad_axis(jnp.transpose(x_nchw, (2, 0, 3, 1)).astype(jnp.bfloat16), 3, cin_p)

    # fold eval-mode BN: scale -> weights, shift -> bias (once, plain JAX)
    s1, b1 = _fold_bn(params["bn1_g"], params["bn1_b"], params["bn1_m"], params["bn1_v"])
    s2, b2 = _fold_bn(params["bn2_g"], params["bn2_b"], params["bn2_m"], params["bn2_v"])
    rhs1 = _w3x3_to_taps(params["w1"], s1, cin_p, cout_p)
    rhs2 = _w3x3_to_taps(params["w2"], s2, cout_p, cout_p)
    b1 = _pad_axis(b1, 1, cout_p)
    b2 = _pad_axis(b2, 1, cout_p)

    # --- conv1 (3x3, stride) + BN1 + ReLU -------------------------------------
    xp1 = jnp.pad(x_t, ((1, 1), (0, 0), (1, 1), (0, 0)))
    cols1 = _dx_im2col(xp1, stride, wo)                       # (H+2, M, 3*cin_p)
    out1 = _conv3x3_tap(cols1, rhs1, b1, ho, stride, out_dtype=jnp.bfloat16)
    if out1.shape[1] != m:
        out1 = out1[:, :m, :]
    out1 = out1.reshape(ho, n, wo, cout_p)                    # padded channels are 0

    # --- conv2 (3x3, s=1) + BN2 + shortcut + ReLU (shortcut fused in-kernel) ---
    xp2 = jnp.pad(out1, ((1, 1), (0, 0), (1, 1), (0, 0)))
    cols2 = _dx_im2col(xp2, 1, wo)                            # (Ho+2, M, 3*cout_p)
    if stride != 1 or cin != cout:
        ss, bs = _fold_bn(params["bns_g"], params["bns_b"],
                          params["bns_m"], params["bns_v"])
        ws = jnp.transpose(params["ws"].reshape(cout, cin), (1, 0)) * ss.reshape(1, cout)
        ws = _pad_axis(_pad_axis(ws, 0, cin_p), 1, cout_p).astype(jnp.bfloat16)
        xs = x_t[::stride, :, ::stride, :][:ho, :, :wo, :].reshape(ho, m, cin_p)
        out2 = _conv3x3_tap(cols2, rhs2, b2 + _pad_axis(bs, 1, cout_p), ho, 1,
                            proj=(xs, ws), out_dtype=jnp.float32)
    else:
        res = _pad_axis(x_t, 3, cout_p).reshape(ho, m, cout_p)
        out2 = _conv3x3_tap(cols2, rhs2, b2, ho, 1,
                            residual=res, out_dtype=jnp.float32)

    if out2.shape[1] != m or cout_p != cout:
        out2 = out2[:, :m, :cout]
    # TODO(synk): when chaining BasicBlocks, keep this (H, N, W, C)/bf16 layout
    # between blocks and transpose to NCHW only at the network boundary.
    return jnp.transpose(out2.reshape(ho, n, wo, cout), (1, 3, 0, 2))   # NCHW


# ----------------------------------------------------------------------------
# Pure-JAX reference (eval-mode BN, f32) for verification
# ----------------------------------------------------------------------------
def _ref_conv(x_nchw, w, stride, pad):
    return jax.lax.conv_general_dilated(
        x_nchw, w, window_strides=(stride, stride),
        padding=((pad, pad), (pad, pad)),
        dimension_numbers=("NCHW", "OIHW", "NCHW"))


def _ref_bn(x_nchw, g, b, m, v, eps=1e-5):
    sc = (g / jnp.sqrt(v + eps)).reshape(1, -1, 1, 1)
    bi = (b - m * g / jnp.sqrt(v + eps)).reshape(1, -1, 1, 1)
    return x_nchw * sc + bi


def basic_block_reference(x, p, stride):
    out = jax.nn.relu(_ref_bn(_ref_conv(x, p["w1"], stride, 1),
                              p["bn1_g"], p["bn1_b"], p["bn1_m"], p["bn1_v"]))
    out = _ref_bn(_ref_conv(out, p["w2"], 1, 1),
                  p["bn2_g"], p["bn2_b"], p["bn2_m"], p["bn2_v"])
    cin, cout = x.shape[1], p["w1"].shape[0]
    if stride != 1 or cin != cout:
        sc = _ref_bn(_ref_conv(x, p["ws"], stride, 0),
                     p["bns_g"], p["bns_b"], p["bns_m"], p["bns_v"])
    else:
        sc = x
    return jax.nn.relu(out + sc)


# ----------------------------------------------------------------------------
if __name__ == "__main__":
    key = jax.random.PRNGKey(0)
    kx, kp1, kp2 = jax.random.split(key, 3)

    x = jax.random.normal(kx, (2, 4, 16, 16), jnp.float32)   # NCHW

    # bf16 MXU operands + bf16 intermediate -> compare against f32 ref at ~1e-2 rel.
    ATOL = 5e-2
    RTOL = 5e-2

    # Case 1: downsampling block (stride=2, channel change -> fused conv shortcut)
    p1 = init_basic_block_params(kp1, in_channels=4, out_channels=8, stride=2)
    y1 = jax.block_until_ready(basic_block_forward(x, p1, stride=2))
    r1 = basic_block_reference(x, p1, 2)
    assert y1.shape == (2, 8, 8, 8), y1.shape
    assert jnp.allclose(y1, r1, atol=ATOL, rtol=RTOL), float(jnp.max(jnp.abs(y1 - r1)))

    # Case 2: identity-shortcut block (stride=1, same channels)
    p2 = init_basic_block_params(kp2, in_channels=4, out_channels=4, stride=1)
    y2 = jax.block_until_ready(basic_block_forward(x, p2, stride=1))
    r2 = basic_block_reference(x, p2, 1)
    assert y2.shape == (2, 4, 16, 16), y2.shape
    assert jnp.allclose(y2, r2, atol=ATOL, rtol=RTOL), float(jnp.max(jnp.abs(y2 - r2)))

    print("KERNEL_OK")
</pallas_src>

<mosaic_0001>
module attributes {stable_mosaic.version = 11 : i64} {
  func.func @_tap_kernel(%arg0: i32, %arg1: i32, %arg2: i32, %arg3: memref<1x16x24xbf16, #tpu.memory_space<vmem>>, %arg4: memref<3x24x128xbf16, #tpu.memory_space<vmem>>, %arg5: memref<1x128xf32, #tpu.memory_space<vmem>>, %arg6: memref<1x16x128xbf16, #tpu.memory_space<vmem>>, %arg7: memref<16x128xf32, #tpu.memory_space<vmem>>) attributes {dimension_semantics = [#tpu.dimension_semantics<parallel>, #tpu.dimension_semantics<parallel>, #tpu.dimension_semantics<arbitrary>], iteration_bounds = array<i64: 1, 8, 3>, scalar_prefetch = 0 : i64, scratch_operands = 1 : i64, tpu.core_type = #tpu.core_type<tc>, window_params = [{transform_indices = @transform_0, window_bounds = array<i64: 1, 16, 24>}, {pipeline_mode = #tpu.pipeline_mode<synchronous>, transform_indices = @transform_1, window_bounds = array<i64: 3, 24, 128>}, {pipeline_mode = #tpu.pipeline_mode<synchronous>, transform_indices = @transform_2, window_bounds = array<i64: 1, 128>}, {transform_indices = @transform_3, window_bounds = array<i64: 1, 16, 128>}]} {
    %c0_i32 = arith.constant 0 : i32
    %0 = arith.cmpi eq, %arg2, %c0_i32 : i32
    %1 = arith.extui %0 : i1 to i32
    %c0_i32_0 = arith.constant 0 : i32
    %2 = arith.cmpi ne, %1, %c0_i32_0 : i32
    scf.if %2 {
      %cst_10 = arith.constant 0.000000e+00 : f32
      %15 = vector.broadcast %cst_10 : f32 to vector<16x128xf32>
      %c0_11 = arith.constant 0 : index
      %c0_12 = arith.constant 0 : index
      %16 = vector.load %arg7[%c0_11, %c0_12] : memref<16x128xf32, #tpu.memory_space<vmem>>, vector<16x128xf32>
      tpu.vector_store %arg7[%c0_11, %c0_12], %15 {strides = array<i32>} : memref<16x128xf32, #tpu.memory_space<vmem>>, vector<16x128xf32>,
    } else {
    }
    %c0 = arith.constant 0 : index
    %c0_1 = arith.constant 0 : index
    %3 = vector.load %arg7[%c0, %c0_1] : memref<16x128xf32, #tpu.memory_space<vmem>>, vector<16x128xf32>
    %c0_2 = arith.constant 0 : index
    %c0_3 = arith.constant 0 : index
    %c0_4 = arith.constant 0 : index
    %4 = vector.load %arg3[%c0_2, %c0_3, %c0_4] : memref<1x16x24xbf16, #tpu.memory_space<vmem>>, vector<1x16x24xbf16>
    %5 = vector.shape_cast %4 : vector<1x16x24xbf16> to vector<16x24xbf16>
    %6 = arith.index_cast %arg2 : i32 to index
    %c0_5 = arith.constant 0 : index
    %c0_6 = arith.constant 0 : index
    %7 = vector.load %arg4[%6, %c0_5, %c0_6] : memref<3x24x128xbf16, #tpu.memory_space<vmem>>, vector<1x24x128xbf16>
    %8 = vector.shape_cast %7 : vector<1x24x128xbf16> to vector<24x128xbf16>
    %cst = arith.constant dense<0.000000e+00> : vector<16x128xf32>
    %9 = tpu.matmul %5, %8, %cst {dimension_numbers = #tpu.dot_dimension_numbers<[1], [0], [0], [1], [0, 0, 1, 1], [], []>} : vector<16x24xbf16>, vector<24x128xbf16>, vector<16x128xf32> -> vector<16x128xf32>
    %10 = arith.addf %3, %9 : vector<16x128xf32>
    %c0_7 = arith.constant 0 : index
    %c0_8 = arith.constant 0 : index
    %11 = vector.load %arg7[%c0_7, %c0_8] : memref<16x128xf32, #tpu.memory_space<vmem>>, vector<16x128xf32>
    tpu.vector_store %arg7[%c0_7, %c0_8], %10 {strides = array<i32>} : memref<16x128xf32, #tpu.memory_space<vmem>>, vector<16x128xf32>,
    %c2_i32 = arith.constant 2 : i32
    %12 = arith.cmpi eq, %arg2, %c2_i32 : i32
    %13 = arith.extui %12 : i1 to i32
    %c0_i32_9 = arith.constant 0 : i32
    %14 = arith.cmpi ne, %13, %c0_i32_9 : i32
    scf.if %14 {
      %c0_10 = arith.constant 0 : index
      %c0_11 = arith.constant 0 : index
      %15 = vector.load %arg7[%c0_10, %c0_11] : memref<16x128xf32, #tpu.memory_space<vmem>>, vector<16x128xf32>
      %c0_12 = arith.constant 0 : index
      %c0_13 = arith.constant 0 : index
      %16 = vector.load %arg5[%c0_12, %c0_13] : memref<1x128xf32, #tpu.memory_space<vmem>>, vector<1x128xf32>
      %17 = vector.broadcast %16 : vector<1x128xf32> to vector<16x128xf32>
      %18 = arith.addf %15, %17 : vector<16x128xf32>
      %cst_14 = arith.constant 0.000000e+00 : f32
      %19 = vector.broadcast %cst_14 : f32 to vector<16x128xf32>
      %20 = arith.maximumf %18, %19 : vector<16x128xf32>
      %21 = arith.truncf %20 : vector<16x128xf32> to vector<16x128xbf16>
      %c0_15 = arith.constant 0 : index
      %c0_16 = arith.constant 0 : index
      %c0_17 = arith.constant 0 : index
      %22 = vector.load %arg6[%c0_15, %c0_16, %c0_17] : memref<1x16x128xbf16, #tpu.memory_space<vmem>>, vector<1x16x128xbf16>
      %23 = vector.shape_cast %22 : vector<1x16x128xbf16> to vector<16x128xbf16>
      %24 = vector.shape_cast %21 : vector<16x128xbf16> to vector<1x16x128xbf16>
      tpu.vector_store %arg6[%c0_15, %c0_16, %c0_17], %24 {strides = array<i32>} : memref<1x16x128xbf16, #tpu.memory_space<vmem>>, vector<1x16x128xbf16>,
    } else {
    }
    return
  }
  func.func @transform_0(%arg0: i32, %arg1: i32, %arg2: i32) -> (i32, i32, i32) {
    %c2_i32 = arith.constant 2 : i32
    %0 = arith.muli %arg1, %c2_i32 : i32
    %1 = arith.addi %0, %arg2 : i32
    %c0_i32 = arith.constant 0 : i32
    %c0_i32_0 = arith.constant 0 : i32
    return %1, %arg0, %c0_i32 : i32, i32, i32
  }
  func.func @transform_1(%arg0: i32, %arg1: i32, %arg2: i32) -> (i32, i32, i32) {
    %c0_i32 = arith.constant 0 : i32
    %c0_i32_0 = arith.constant 0 : i32
    %c0_i32_1 = arith.constant 0 : i32
    %c0_i32_2 = arith.constant 0 : i32
    return %c0_i32, %c0_i32_0, %c0_i32_1 : i32, i32, i32
  }
  func.func @transform_2(%arg0: i32, %arg1: i32, %arg2: i32) -> (i32, i32) {
    %c0_i32 = arith.constant 0 : i32
    %c0_i32_0 = arith.constant 0 : i32
    %c0_i32_1 = arith.constant 0 : i32
    return %c0_i32, %c0_i32_0 : i32, i32
  }
  func.func @transform_3(%arg0: i32, %arg1: i32, %arg2: i32) -> (i32, i32, i32) {
    %c0_i32 = arith.constant 0 : i32
    %c0_i32_0 = arith.constant 0 : i32
    return %arg1, %arg0, %c0_i32 : i32, i32, i32
  }
}

module attributes {stable_mosaic.version = 11 : i64} {
  func.func @_tap_kernel_proj(%arg0: i32, %arg1: i32, %arg2: i32, %arg3: memref<1x16x384xbf16, #tpu.memory_space<vmem>>, %arg4: memref<3x384x128xbf16, #tpu.memory_space<vmem>>, %arg5: memref<1x128xf32, #tpu.memory_space<vmem>>, %arg6: memref<1x16x8xbf16, #tpu.memory_space<vmem>>, %arg7: memref<8x128xbf16, #tpu.memory_space<vmem>>, %arg8: memref<1x16x128xf32, #tpu.memory_space<vmem>>, %arg9: memref<16x128xf32, #tpu.memory_space<vmem>>) attributes {dimension_semantics = [#tpu.dimension_semantics<parallel>, #tpu.dimension_semantics<parallel>, #tpu.dimension_semantics<arbitrary>], iteration_bounds = array<i64: 1, 8, 3>, scalar_prefetch = 0 : i64, scratch_operands = 1 : i64, tpu.core_type = #tpu.core_type<tc>, window_params = [{transform_indices = @transform_0, window_bounds = array<i64: 1, 16, 384>}, {pipeline_mode = #tpu.pipeline_mode<synchronous>, transform_indices = @transform_1, window_bounds = array<i64: 3, 384, 128>}, {pipeline_mode = #tpu.pipeline_mode<synchronous>, transform_indices = @transform_2, window_bounds = array<i64: 1, 128>}, {transform_indices = @transform_3, window_bounds = array<i64: 1, 16, 8>}, {pipeline_mode = #tpu.pipeline_mode<synchronous>, transform_indices = @transform_4, window_bounds = array<i64: 8, 128>}, {transform_indices = @transform_5, window_bounds = array<i64: 1, 16, 128>}]} {
    %c0_i32 = arith.constant 0 : i32
    %0 = arith.cmpi eq, %arg2, %c0_i32 : i32
    %1 = arith.extui %0 : i1 to i32
    %c0_i32_0 = arith.constant 0 : i32
    %2 = arith.cmpi ne, %1, %c0_i32_0 : i32
    scf.if %2 {
      %c0_10 = arith.constant 0 : index
      %c0_11 = arith.constant 0 : index
      %c0_12 = arith.constant 0 : index
      %15 = vector.load %arg6[%c0_10, %c0_11, %c0_12] : memref<1x16x8xbf16, #tpu.memory_space<vmem>>, vector<1x16x8xbf16>
      %16 = vector.shape_cast %15 : vector<1x16x8xbf16> to vector<16x8xbf16>
      %c0_13 = arith.constant 0 : index
      %c0_14 = arith.constant 0 : index
      %17 = vector.load %arg7[%c0_13, %c0_14] : memref<8x128xbf16, #tpu.memory_space<vmem>>, vector<8x128xbf16>
      %cst_15 = arith.constant dense<0.000000e+00> : vector<16x128xf32>
      %18 = tpu.matmul %16, %17, %cst_15 {dimension_numbers = #tpu.dot_dimension_numbers<[1], [0], [0], [1], [0, 0, 1, 1], [], []>} : vector<16x8xbf16>, vector<8x128xbf16>, vector<16x128xf32> -> vector<16x128xf32>
      %c0_16 = arith.constant 0 : index
      %c0_17 = arith.constant 0 : index
      %19 = vector.load %arg9[%c0_16, %c0_17] : memref<16x128xf32, #tpu.memory_space<vmem>>, vector<16x128xf32>
      tpu.vector_store %arg9[%c0_16, %c0_17], %18 {strides = array<i32>} : memref<16x128xf32, #tpu.memory_space<vmem>>, vector<16x128xf32>,
    } else {
    }
    %c0 = arith.constant 0 : index
    %c0_1 = arith.constant 0 : index
    %3 = vector.load %arg9[%c0, %c0_1] : memref<16x128xf32, #tpu.memory_space<vmem>>, vector<16x128xf32>
    %c0_2 = arith.constant 0 : index
    %c0_3 = arith.constant 0 : index
    %c0_4 = arith.constant 0 : index
    %4 = vector.load %arg3[%c0_2, %c0_3, %c0_4] : memref<1x16x384xbf16, #tpu.memory_space<vmem>>, vector<1x16x384xbf16>
    %5 = vector.shape_cast %4 : vector<1x16x384xbf16> to vector<16x384xbf16>
    %6 = arith.index_cast %arg2 : i32 to index
    %c0_5 = arith.constant 0 : index
    %c0_6 = arith.constant 0 : index
    %7 = vector.load %arg4[%6, %c0_5, %c0_6] : memref<3x384x128xbf16, #tpu.memory_space<vmem>>, vector<1x384x128xbf16>
    %8 = vector.shape_cast %7 : vector<1x384x128xbf16> to vector<384x128xbf16>
    %cst = arith.constant dense<0.000000e+00> : vector<16x128xf32>
    %9 = tpu.matmul %5, %8, %cst {dimension_numbers = #tpu.dot_dimension_numbers<[1], [0], [0], [1], [0, 0, 1, 1], [], []>} : vector<16x384xbf16>, vector<384x128xbf16>, vector<16x128xf32> -> vector<16x128xf32>
    %10 = arith.addf %3, %9 : vector<16x128xf32>
    %c0_7 = arith.constant 0 : index
    %c0_8 = arith.constant 0 : index
    %11 = vector.load %arg9[%c0_7, %c0_8] : memref<16x128xf32, #tpu.memory_space<vmem>>, vector<16x128xf32>
    tpu.vector_store %arg9[%c0_7, %c0_8], %10 {strides = array<i32>} : memref<16x128xf32, #tpu.memory_space<vmem>>, vector<16x128xf32>,
    %c2_i32 = arith.constant 2 : i32
    %12 = arith.cmpi eq, %arg2, %c2_i32 : i32
    %13 = arith.extui %12 : i1 to i32
    %c0_i32_9 = arith.constant 0 : i32
    %14 = arith.cmpi ne, %13, %c0_i32_9 : i32
    scf.if %14 {
      %c0_10 = arith.constant 0 : index
      %c0_11 = arith.constant 0 : index
      %15 = vector.load %arg9[%c0_10, %c0_11] : memref<16x128xf32, #tpu.memory_space<vmem>>, vector<16x128xf32>
      %c0_12 = arith.constant 0 : index
      %c0_13 = arith.constant 0 : index
      %16 = vector.load %arg5[%c0_12, %c0_13] : memref<1x128xf32, #tpu.memory_space<vmem>>, vector<1x128xf32>
      %17 = vector.broadcast %16 : vector<1x128xf32> to vector<16x128xf32>
      %18 = arith.addf %15, %17 : vector<16x128xf32>
      %cst_14 = arith.constant 0.000000e+00 : f32
      %19 = vector.broadcast %cst_14 : f32 to vector<16x128xf32>
      %20 = arith.maximumf %18, %19 : vector<16x128xf32>
      %c0_15 = arith.constant 0 : index
      %c0_16 = arith.constant 0 : index
      %c0_17 = arith.constant 0 : index
      %21 = vector.load %arg8[%c0_15, %c0_16, %c0_17] : memref<1x16x128xf32, #tpu.memory_space<vmem>>, vector<1x16x128xf32>
      %22 = vector.shape_cast %21 : vector<1x16x128xf32> to vector<16x128xf32>
      %23 = vector.shape_cast %20 : vector<16x128xf32> to vector<1x16x128xf32>
      tpu.vector_store %arg8[%c0_15, %c0_16, %c0_17], %23 {strides = array<i32>} : memref<1x16x128xf32, #tpu.memory_space<vmem>>, vector<1x16x128xf32>,
    } else {
    }
    return
  }
  func.func @transform_0(%arg0: i32, %arg1: i32, %arg2: i32) -> (i32, i32, i32) {
    %c1_i32 = arith.constant 1 : i32
    %0 = arith.muli %arg1, %c1_i32 : i32
    %1 = arith.addi %0, %arg2 : i32
    %c0_i32 = arith.constant 0 : i32
    %c0_i32_0 = arith.constant 0 : i32
    return %1, %arg0, %c0_i32 : i32, i32, i32
  }
  func.func @transform_1(%arg0: i32, %arg1: i32, %arg2: i32) -> (i32, i32, i32) {
    %c0_i32 = arith.constant 0 : i32
    %c0_i32_0 = arith.constant 0 : i32
    %c0_i32_1 = arith.constant 0 : i32
    %c0_i32_2 = arith.constant 0 : i32
    return %c0_i32, %c0_i32_0, %c0_i32_1 : i32, i32, i32
  }
  func.func @transform_2(%arg0: i32, %arg1: i32, %arg2: i32) -> (i32, i32) {
    %c0_i32 = arith.constant 0 : i32
    %c0_i32_0 = arith.constant 0 : i32
    %c0_i32_1 = arith.constant 0 : i32
    return %c0_i32, %c0_i32_0 : i32, i32
  }
  func.func @transform_3(%arg0: i32, %arg1: i32, %arg2: i32) -> (i32, i32, i32) {
    %c0_i32 = arith.constant 0 : i32
    %c0_i32_0 = arith.constant 0 : i32
    return %arg1, %arg0, %c0_i32 : i32, i32, i32
  }
  func.func @transform_4(%arg0: i32, %arg1: i32, %arg2: i32) -> (i32, i32) {
    %c0_i32 = arith.constant 0 : i32
    %c0_i32_0 = arith.constant 0 : i32
    %c0_i32_1 = arith.constant 0 : i32
    return %c0_i32, %c0_i32_0 : i32, i32
  }
  func.func @transform_5(%arg0: i32, %arg1: i32, %arg2: i32) -> (i32, i32, i32) {
    %c0_i32 = arith.constant 0 : i32
    %c0_i32_0 = arith.constant 0 : i32
    return %arg1, %arg0, %c0_i32 : i32, i32, i32
  }
}

</mosaic_0001>

<llo_original>
// kernel: basic_block_forward.2
$region0: #{basic_block_forward.2}
  #allocation0 [shape = 'u32[]', space=smem, size = 0x4, offset = 0x4, fixed_abs, tag = 'smem constant byte address 0x4 - core index']
  #allocation1 [shape = 'u32[144,128]{1,0:T(1,128)}', space=vmem, size = 0x12000, scoped, tag = 'internal scratch']
  #allocation2 [shape = 'f32[16,128]{1,0:T(8,128)}', space=vmem, size = 0x2000, scoped, tag = 'scratch operand']
  %s0 = inlined_call_operand.vmem [shape: bf16[18,16,24], index: 0, kind: input, shape index: {}]
  %s1 = inlined_call_operand.vmem [shape: bf16[3,24,128], index: 1, kind: input, shape index: {}]
  %s2 = inlined_call_operand.vmem [shape: f32[1,128], index: 2, kind: input, shape index: {}]
  %s3 = inlined_call_operand.vmem [shape: bf16[8,16,128], index: 3, kind: output, shape index: {}]
  %s4 = sld [smem:[#allocation0]]
  $region53: #{basic_block_forward.2} parent=0
    _
  %s6 = ssub.s32 1, %s4
  %s7 = scalar_select 0, %s6, %s4
  loop: start=0, step=1, limit=26
  $region2: #{basic_block_forward.2} parent=0 // loop_pre_header
    _
  $region3: #{basic_block_forward.2} parent=0 // loop_header
    %s9 = sphi 0, %s13
    %p10 = scmp.ge.s32.totalorder %s9, 26
    %s16 = sphi 0, %s35
    %s17 = sphi 0, %s31
    %s18 = sphi 0, %s27
    %s19 = sphi 0, %s16
    %s20 = sphi 0, %s17
    %s21 = sphi 0, %s18
    %s22 = sphi 0, %s19
    %s23 = sphi 0, %s20
    %s24 = sphi 0, %s21
    %s44 = sphi 0, %s46
    %s47 = sphi 0, %s44
    %s48 = sphi 0, %s47
    %s64 = sphi 0, %s48
    %s68 = sphi 0, %s68
    %s70 = sphi 0, %s68
    %s71 = sphi 0, %s70
    %s85 = sphi 0, %s71
    %s89 = sphi 0, %s89
    %s91 = sphi 0, %s89
    %s92 = sphi 0, %s91
    %s106 = sphi 0, %s92
    %s114 = sphi 0, %s116
    %s117 = sphi 0, %s114
    %s118 = sphi 0, %s117
    %s134 = sphi 0, %s118
  $region4: #{basic_block_forward.2} parent=0 // loop_header_branch
    %12 = sbr.rel (%p10) target = $region8
  $region5: #{basic_block_forward.2} parent=0 // loop_body
    %s14 = ssub.s32 %s9, 1
    %s15 = ssub.s32 %s9, 2
    %s25 = sadd.s32 1, %s18
    %p26 = scmp.ge.s32.totalorder %s25, 3
    %s27 = scalar_select %p26, 0, %s25
    %s28 = sadd.s32 1, %s17
    %s29 = scalar_select %p26, %s28, %s17
    %p30 = scmp.ge.s32.totalorder %s29, 8
    %s31 = scalar_select %p30, 0, %s29
    %s32 = sadd.s32 1, %s16
    %s33 = scalar_select %p30, %s32, %s16
    %p34 = scmp.ge.s32.totalorder %s33, 1
    %s35 = scalar_select %p34, 0, %s33
    %s36 = smul.u32 %s17, 2
    %s37 = sadd.s32 %s36, %s18
    %s38 = smul.u32 %s31, 2
    %s39 = sadd.s32 %s38, %s27
    %s40 = ssub.s32 %s37, %s39
    %s41 = ssub.s32 %s16, %s35
    %s42 = sor.u32 %s40, %s41
    %p43 = scmp.eq.s32.totalorder %s42, 0
    %s45 = sadd.s32 %s44, 1
    %s46 = scalar_select %p43, %s44, %s45
    %p49 = pneg %p43
    %p50 = scmp.eq.s32.totalorder %s9, 23
    %p51 = por %p49, %p50
    %p52 = scmp.ne.s32.totalorder %s44, %s47
    %p53 = scmp.eq.s32.totalorder %s9, 0
    %p54 = por %p52, %p53
    %p55 = scmp.ne.s32.totalorder %s44, %s47
    %p56 = scmp.eq.s32.totalorder %s14, 23
    %p57 = por %p55, %p56
    %p58 = scmp.ne.s32.totalorder %s47, %s48
    %p59 = scmp.eq.s32.totalorder %s14, 0
    %p60 = por %p58, %p59
    %p61 = scmp.ne.s32.totalorder %s47, %s48
    %p62 = scmp.eq.s32.totalorder %s15, 23
    %p63 = por %p61, %p62
    %p65 = scmp.ne.s32.totalorder %s48, %s64
    %p66 = scmp.eq.s32.totalorder %s15, 0
    %p67 = por %p65, %p66
    %s69 = sadd.s32 %s68, 1
    %p72 = scmp.eq.s32.totalorder %s9, 23
    %p73 = scmp.ne.s32.totalorder %s68, %s70
    %p74 = scmp.eq.s32.totalorder %s9, 0
    %p75 = por %p73, %p74
    %p76 = scmp.ne.s32.totalorder %s68, %s70
    %p77 = scmp.eq.s32.totalorder %s14, 23
    %p78 = por %p76, %p77
    %p79 = scmp.ne.s32.totalorder %s70, %s71
    %p80 = scmp.eq.s32.totalorder %s14, 0
    %p81 = por %p79, %p80
    %p82 = scmp.ne.s32.totalorder %s70, %s71
    %p83 = scmp.eq.s32.totalorder %s15, 23
    %p84 = por %p82, %p83
    %p86 = scmp.ne.s32.totalorder %s71, %s85
    %p87 = scmp.eq.s32.totalorder %s15, 0
    %p88 = por %p86, %p87
    %s90 = sadd.s32 %s89, 1
    %p93 = scmp.eq.s32.totalorder %s9, 23
    %p94 = scmp.ne.s32.totalorder %s89, %s91
    %p95 = scmp.eq.s32.totalorder %s9, 0
    %p96 = por %p94, %p95
    %p97 = scmp.ne.s32.totalorder %s89, %s91
    %p98 = scmp.eq.s32.totalorder %s14, 23
    %p99 = por %p97, %p98
    %p100 = scmp.ne.s32.totalorder %s91, %s92
    %p101 = scmp.eq.s32.totalorder %s14, 0
    %p102 = por %p100, %p101
    %p103 = scmp.ne.s32.totalorder %s91, %s92
    %p104 = scmp.eq.s32.totalorder %s15, 23
    %p105 = por %p103, %p104
    %p107 = scmp.ne.s32.totalorder %s92, %s106
    %p108 = scmp.eq.s32.totalorder %s15, 0
    %p109 = por %p107, %p108
    %s110 = ssub.s32 %s17, %s31
    %s111 = ssub.s32 %s16, %s35
    %s112 = sor.u32 %s110, %s111
    %p113 = scmp.eq.s32.totalorder %s112, 0
    %s115 = sadd.s32 %s114, 1
    %s116 = scalar_select %p113, %s114, %s115
    %p119 = pneg %p113
    %p120 = scmp.eq.s32.totalorder %s9, 23
    %p121 = por %p119, %p120
    %p122 = scmp.ne.s32.totalorder %s114, %s117
    %p123 = scmp.eq.s32.totalorder %s9, 0
    %p124 = por %p122, %p123
    %p125 = scmp.ne.s32.totalorder %s114, %s117
    %p126 = scmp.eq.s32.totalorder %s14, 23
    %p127 = por %p125, %p126
    %p128 = scmp.ne.s32.totalorder %s117, %s118
    %p129 = scmp.eq.s32.totalorder %s14, 0
    %p130 = por %p128, %p129
    %p131 = scmp.ne.s32.totalorder %s117, %s118
    %p132 = scmp.eq.s32.totalorder %s15, 23
    %p133 = por %p131, %p132
    %p135 = scmp.ne.s32.totalorder %s118, %s134
    %p136 = scmp.eq.s32.totalorder %s15, 0
    %p137 = por %p135, %p136
    %p138 = scmp.le.s32.totalorder 1, %s9
    %p139 = scmp.lt.s32.totalorder %s9, 25
    %p140 = pnand %p138, %p139
    %p141 = pneg %p140
    // Predicated region
    $region9: #{basic_block_forward.2} parent=5 // pred_check
      _
    $region10: #{basic_block_forward.2} parent=5 // pred_check_branch
      %143 = sbr.rel (%p140) target = $region12
    $region11: #{basic_block_forward.2} parent=5 // pred_region
      %s144 = ssub.s32 %s9, 1
      // Predicated region
      $region13: #{basic_block_forward.2} parent=11 // pred_check
        %p145 = pneg %p81
      $region14: #{basic_block_forward.2} parent=11 // pred_check_branch
        %147 = sbr.rel (%p145) target = $region16
      $region15: #{basic_block_forward.2} parent=11 // pred_region
        _
      $region16: #{basic_block_forward.2} parent=11 // pred_fallthru
        _
      // Predicated region
      $region17: #{basic_block_forward.2} parent=11 // pred_check
        %p148 = pneg %p102
      $region18: #{basic_block_forward.2} parent=11 // pred_check_branch
        %150 = sbr.rel (%p148) target = $region20
      $region19: #{basic_block_forward.2} parent=11 // pred_region
        _
      $region20: #{basic_block_forward.2} parent=11 // pred_fallthru
        _
    $region12: #{basic_block_forward.2} parent=5 // pred_fallthru
      _
    %p151 = scmp.lt.s32.totalorder %s9, 24
    // Predicated region
    $region21: #{basic_block_forward.2} parent=5 // pred_check
      %p152 = pneg %p151
    $region22: #{basic_block_forward.2} parent=5 // pred_check_branch
      %154 = sbr.rel (%p152) target = $region24
    $region23: #{basic_block_forward.2} parent=5 // pred_region
      // Predicated region
      $region25: #{basic_block_forward.2} parent=23 // pred_check
        %p155 = pneg %p54
      $region26: #{basic_block_forward.2} parent=23 // pred_check_branch
        %157 = sbr.rel (%p155) target = $region28
      $region27: #{basic_block_forward.2} parent=23 // pred_region
        %s158 = smul.u32 %s17, 2
        %s159 = sadd.s32 %s158, %s18
        %s160 = smul.u32 2, %s16
        %p161 = scmp.lt.s32.totalorder %s159, 17
        %s162 = scalar_select %p161, %s159, 17
        %p163 = scmp.lt.s32.totalorder %s160, 1
        %s164 = scalar_select %p163, %s160, 1
        %s165 = smul.addr %s162, 2
        %s166 = sadd.s32 %s164, %s165
        %s167 = smul.addr %s166, 4
        %s168 = scalar_lea.vmem %s0, %s167
        %s169 = smul.u32 %s17, 2
        %s170 = sadd.s32 %s169, %s18
        %s171 = smul.u32 2, %s16
      $region28: #{basic_block_forward.2} parent=23 // pred_fallthru
        _
    $region24: #{basic_block_forward.2} parent=5 // pred_fallthru
      _
    %p172 = scmp.le.s32.totalorder 1, %s9
    %p173 = scmp.lt.s32.totalorder %s9, 25
    %p174 = pnand %p172, %p173
    %p175 = pneg %p174
    // Predicated region
    $region29: #{basic_block_forward.2} parent=5 // pred_check
      _
    $region30: #{basic_block_forward.2} parent=5 // pred_check_branch
      %177 = sbr.rel (%p174) target = $region32
    $region31: #{basic_block_forward.2} parent=5 // pred_region
      %s178 = ssub.s32 %s9, 1
      %s179 = smul.u32 %s20, 2
      %s180 = sadd.s32 %s179, %s21
      %s181 = smul.u32 2, %s19
      %p182 = scmp.lt.s32.totalorder %s180, 17
      %s183 = scalar_select %p182, %s180, 17
      %p184 = scmp.lt.s32.totalorder %s181, 1
      %s185 = scalar_select %p184, %s181, 1
      %s186 = smul.addr %s183, 2
      %s187 = sadd.s32 %s185, %s186
      %s188 = smul.addr %s187, 4
      %s189 = scalar_lea.vmem %s0, %s188
      %p190 = pneg %p60
      %p191 = pneg %p57
      %p192 = pneg %p81
      %p193 = pneg %p78
      %p194 = pneg %p102
      %p195 = pneg %p99
      %p196 = pneg %p130
      %p197 = pneg %p127
      %s198 = smul.u32 2, %s19
      %p199 = scmp.lt.s32.totalorder %s20, 7
      %s200 = scalar_select %p199, %s20, 7
      %p201 = scmp.lt.s32.totalorder %s198, 1
      %s202 = scalar_select %p201, %s198, 1
      %s203 = smul.addr %s200, 2
      %s204 = sadd.s32 %s202, %s203
      %s205 = smul.addr %s204, 4
      %s206 = scalar_lea.vmem %s3, %s205
      %s207 = smul.u32 %s20, 2
      %s208 = sadd.s32 %s207, %s21
      %s209 = smul.u32 2, %s19
      %p210 = scmp.lt.s32.totalorder %s208, 17
      %s211 = scalar_select %p210, %s208, 17
      %p212 = scmp.lt.s32.totalorder %s209, 1
      %s213 = scalar_select %p212, %s209, 1
      %s214 = smul.addr %s211, 2
      %s215 = sadd.s32 %s213, %s214
      %s216 = smul.addr %s215, 4
      %s217 = scalar_lea.vmem %s0, %s216
      %s218 = smul.u32 %s20, 2
      %s219 = sadd.s32 %s218, %s21
      %s220 = smul.u32 2, %s19
      %s221 = smul.u32 2, %s19
      %p222 = scmp.lt.s32.totalorder %s20, 7
      %s223 = scalar_select %p222, %s20, 7
      %p224 = scmp.lt.s32.totalorder %s221, 1
      %s225 = scalar_select %p224, %s221, 1
      %s226 = smul.addr %s223, 2
      %s227 = sadd.s32 %s225, %s226
      %s228 = smul.addr %s227, 4
      %s229 = scalar_lea.vmem %s3, %s228
      %s230 = smul.u32 2, %s19
      %p232 = scmp.eq.s32.totalorder %s21, 0
      // Predicated region
      $region33: #{basic_block_forward.2} parent=31 // pred_check
        %p233 = pneg %p232
      $region34: #{basic_block_forward.2} parent=31 // pred_check_branch
        %235 = sbr.rel (%p233) target = $region36
      $region35: #{basic_block_forward.2} parent=31 // pred_region
        %236 = vst [vmem:[#allocation2] sm:$0xff] 0.0
        %237 = vst [vmem:[#allocation2 + $0x8] sm:$0xff] 0.0
      $region36: #{basic_block_forward.2} parent=31 // pred_fallthru
        _
      %v238 = vld [vmem:[#allocation2] sm:$0xff]
      %v239 = vld [vmem:[#allocation2 + $0x8] sm:$0xff]
      %v240 = vld [vmem:[%s217] sm:$0xf]
      %v241 = vld [vmem:[%s217 + $0x4] sm:$0xf]
      %s242 = smul.u32 %s21, 3
      %s243 = smul.addr %s242, 4
      %s244 = scalar_lea.vmem %s1, %s243
      %v245 = vld [vmem:[%s244] sm:$0xf]
      %v246 = vld [vmem:[%s244 + $0x4] sm:$0xf]
      %v247 = vld [vmem:[%s244 + $0x8] sm:$0xf]
      %v250 = vunpack.c.l.b16 %v240
      %v251 = vunpack.c.l.b16 %v241
      %v252 = vpack.c.b16 %v251, %v250
      %v256 = vunpack.c.l.b16 %v245
      %v257 = vunpack.c.l.b16 %v246
      %v258 = vunpack.c.l.b16 %v247
      %v259 = vpack.c.b16 %v257, %v256
      %v260 = vpack.c.b16 %v258, %v258
      %vm262 = vcmask 195584
      %v264 = vsel %vm262, %v252, 0
      %vm266 = vcmask 1043456
      %v268 = vsel %vm266, %v260, 0
      %270 = vmatprep.subr.bf16.mxu0 0
      %271 = vmatpush1.bf16.msra.mxu0 %v259
      %272 = vmatprep.subr.bf16.mxu0 0
      %273 = vmatpush1.bf16.msra.mxu0 %v268
      %274 = vmatprep.subr.bf16.mxu0 0
      %275 = vmatpush1.bf16.msra.mxu0 0
      %276 = vmatprep.subr.bf16.mxu0 0
      %277 = vmatpush1.bf16.msra.mxu0 0
      %278 = vmatprep.subr.bf16.mxu0 0
      %279 = vmatpush1.bf16.msra.mxu0 0
      %280 = vmatprep.subr.bf16.mxu0 0
      %281 = vmatpush1.bf16.msra.mxu0 0
      %282 = vmatprep.subr.bf16.mxu0 0
      %283 = vmatpush1.bf16.msra.mxu0 0
      %284 = vmatprep.subr.bf16.mxu0 0
      %285 = vmatpush1.bf16.msra.mxu0 0
      %286 = vmatprep.subr.bf16.mxu0 0
      %287 = vmatpush1.bf16.msra.mxu0 0
      %288 = vmatprep.subr.bf16.mxu0 0
      %289 = vmatpush1.bf16.msra.mxu0 0
      %290 = vmatprep.subr.bf16.mxu0 0
      %291 = vmatpush1.bf16.msra.mxu0 0
      %292 = vmatprep.subr.bf16.mxu0 0
      %293 = vmatpush1.bf16.msra.mxu0 0
      %294 = vmatprep.subr.bf16.mxu0 0
      %295 = vmatpush1.bf16.msra.mxu0 0
      %296 = vmatprep.subr.bf16.mxu0 0
      %297 = vmatpush1.bf16.msra.mxu0 0
      %298 = vmatprep.subr.bf16.mxu0 0
      %299 = vmatpush1.bf16.msra.mxu0 0
      %300 = vmatprep.subr.bf16.mxu0 0
      %301 = vmatpush1.bf16.msra.mxu0 0
      %302 = vmatprep.mubr.bf16.mxu0 0
      %303 = vmatmul.mubr.bf16.gmra.mrb[0].mxu0 %v264
      %v304 = vpop.f32.mrb[0].mxu0
      %v305 = vadd.f32 0.0, %v304
      %v306 = vpop.f32.mrb[0].mxu0
      %v307 = vpop.f32.mrb[0].mxu0
      %v308 = vadd.f32 0.0, %v307
      %v309 = vpop.f32.mrb[0].mxu0
      %310 = vdwg.mxu0
      %v311 = vadd.f32 %v238, %v305
      %v312 = vadd.f32 %v239, %v308
      %313 = vst [vmem:[#allocation2] sm:$0xff] %v311
      %314 = vst [vmem:[#allocation2 + $0x8] sm:$0xff] %v312
      %p315 = scmp.eq.s32.totalorder %s21, 2
      // Predicated region
      $region37: #{basic_block_forward.2} parent=31 // pred_check
        %p316 = pneg %p315
      $region38: #{basic_block_forward.2} parent=31 // pred_check_branch
        %318 = sbr.rel (%p316) target = $region40
      $region39: #{basic_block_forward.2} parent=31 // pred_region
        %v319 = vld [vmem:[#allocation2] sm:$0xff]
        %v320 = vld [vmem:[#allocation2 + $0x8] sm:$0xff]
        %v321 = vld [vmem:[%s2] sm:$0x1]
        %v323 = vlaneseq
        %v324 = vshrl.u32 %v323, 7
        %v325 = vsub.s32 0, %v324
        %v326 = vrot.slane %v321, %v325
        %v328 = vadd.f32 %v319, %v326
        %v329 = vadd.f32 %v320, %v326
        %v330 = vmax.f32 %v328, 0.0
        %v331 = vmax.f32 %v329, 0.0
        %v332 = vpack.c.bf16 %v331, %v330
        %v334 = vunpack.c.l.b16 %v332
        %v335 = vunpack.c.h.b16 %v332
        %v336 = vpack.c.b16 %v334, %v334
        %v337 = vpack.c.b16 %v335, %v335
        %340 = vst [vmem:[%s229] sm:$0xf] %v336
        %341 = vst [vmem:[%s229 + $0x4] sm:$0xf] %v337
      $region40: #{basic_block_forward.2} parent=31 // pred_fallthru
        _
      %s342 = smul.u32 2, %s19
      %p343 = scmp.lt.s32.totalorder %s20, 7
      %s344 = scalar_select %p343, %s20, 7
      %p345 = scmp.lt.s32.totalorder %s342, 1
      %s346 = scalar_select %p345, %s342, 1
      %s347 = smul.addr %s344, 2
      %s348 = sadd.s32 %s346, %s347
      %s349 = smul.addr %s348, 4
      %s350 = scalar_lea.vmem %s3, %s349
      // Predicated region
      $region41: #{basic_block_forward.2} parent=31 // pred_check
        %p351 = pneg %p127
      $region42: #{basic_block_forward.2} parent=31 // pred_check_branch
        %353 = sbr.rel (%p351) target = $region44
      $region43: #{basic_block_forward.2} parent=31 // pred_region
        %s354 = smul.u32 2, %s19
      $region44: #{basic_block_forward.2} parent=31 // pred_fallthru
        _
    $region32: #{basic_block_forward.2} parent=5 // pred_fallthru
      _
    %p355 = scmp.le.s32.totalorder 2, %s9
    // Predicated region
    $region45: #{basic_block_forward.2} parent=5 // pred_check
      %p356 = pneg %p355
    $region46: #{basic_block_forward.2} parent=5 // pred_check_branch
      %358 = sbr.rel (%p356) target = $region48
    $region47: #{basic_block_forward.2} parent=5 // pred_region
      %s359 = ssub.s32 %s9, 2
      // Predicated region
      $region49: #{basic_block_forward.2} parent=47 // pred_check
        %p360 = pneg %p133
      $region50: #{basic_block_forward.2} parent=47 // pred_check_branch
        %362 = sbr.rel (%p360) target = $region52
      $region51: #{basic_block_forward.2} parent=47 // pred_region
        %s363 = smul.u32 2, %s22
        %p364 = scmp.lt.s32.totalorder %s23, 7
        %s365 = scalar_select %p364, %s23, 7
        %p366 = scmp.lt.s32.totalorder %s363, 1
        %s367 = scalar_select %p366, %s363, 1
        %s368 = smul.addr %s365, 2
        %s369 = sadd.s32 %s367, %s368
        %s370 = smul.addr %s369, 4
        %s371 = scalar_lea.vmem %s3, %s370
      $region52: #{basic_block_forward.2} parent=47 // pred_fallthru
        _
    $region48: #{basic_block_forward.2} parent=5 // pred_fallthru
      _
  $region6: #{basic_block_forward.2} parent=0 // loop_footer
    %s13 = sadd.s32 1, %s9
  $region7: #{basic_block_forward.2} parent=0 // loop_footer_branch
    %8 = sbr.rel target = $region3
  $region8: #{basic_block_forward.2} parent=0 // loop_exit
    _

// kernel: basic_block_forward.3
$region0: #{basic_block_forward.3}
  #allocation0 [shape = 'u32[]', space=smem, size = 0x4, offset = 0x4, fixed_abs, tag = 'smem constant byte address 0x4 - core index']
  #allocation1 [shape = 'u32[144,128]{1,0:T(1,128)}', space=vmem, size = 0x12000, scoped, tag = 'internal scratch']
  #allocation2 [shape = 'f32[16,128]{1,0:T(8,128)}', space=vmem, size = 0x2000, scoped, tag = 'scratch operand']
  %s0 = inlined_call_operand.vmem [shape: bf16[10,16,384], index: 0, kind: input, shape index: {}]
  %s1 = inlined_call_operand.vmem [shape: bf16[3,384,128], index: 1, kind: input, shape index: {}]
  %s2 = inlined_call_operand.vmem [shape: f32[1,128], index: 2, kind: input, shape index: {}]
  %s3 = inlined_call_operand.vmem [shape: bf16[8,16,8], index: 3, kind: input, shape index: {}]
  %s4 = inlined_call_operand.vmem [shape: bf16[8,128], index: 4, kind: input, shape index: {}]
  %s5 = inlined_call_operand.vmem [shape: f32[8,16,128], index: 5, kind: output, shape index: {}]
  %s6 = sld [smem:[#allocation0]]
  $region61: #{basic_block_forward.3} parent=0
    _
  %s8 = ssub.s32 1, %s6
  %s9 = scalar_select 0, %s8, %s6
  loop: start=0, step=1, limit=26
  $region2: #{basic_block_forward.3} parent=0 // loop_pre_header
    _
  $region3: #{basic_block_forward.3} parent=0 // loop_header
    %s11 = sphi 0, %s15
    %p12 = scmp.ge.s32.totalorder %s11, 26
    %s18 = sphi 0, %s37
    %s19 = sphi 0, %s33
    %s20 = sphi 0, %s29
    %s21 = sphi 0, %s18
    %s22 = sphi 0, %s19
    %s23 = sphi 0, %s20
    %s24 = sphi 0, %s21
    %s25 = sphi 0, %s22
    %s26 = sphi 0, %s23
    %s44 = sphi 0, %s46
    %s47 = sphi 0, %s44
    %s48 = sphi 0, %s47
    %s64 = sphi 0, %s48
    %s68 = sphi 0, %s68
    %s70 = sphi 0, %s68
    %s71 = sphi 0, %s70
    %s85 = sphi 0, %s71
    %s89 = sphi 0, %s89
    %s91 = sphi 0, %s89
    %s92 = sphi 0, %s91
    %s106 = sphi 0, %s92
    %s114 = sphi 0, %s116
    %s117 = sphi 0, %s114
    %s118 = sphi 0, %s117
    %s134 = sphi 0, %s118
    %s138 = sphi 0, %s138
    %s140 = sphi 0, %s138
    %s141 = sphi 0, %s140
    %s155 = sphi 0, %s141
    %s163 = sphi 0, %s165
    %s166 = sphi 0, %s163
    %s167 = sphi 0, %s166
    %s183 = sphi 0, %s167
  $region4: #{basic_block_forward.3} parent=0 // loop_header_branch
    %14 = sbr.rel (%p12) target = $region8
  $region5: #{basic_block_forward.3} parent=0 // loop_body
    %s16 = ssub.s32 %s11, 1
    %s17 = ssub.s32 %s11, 2
    %s27 = sadd.s32 1, %s20
    %p28 = scmp.ge.s32.totalorder %s27, 3
    %s29 = scalar_select %p28, 0, %s27
    %s30 = sadd.s32 1, %s19
    %s31 = scalar_select %p28, %s30, %s19
    %p32 = scmp.ge.s32.totalorder %s31, 8
    %s33 = scalar_select %p32, 0, %s31
    %s34 = sadd.s32 1, %s18
    %s35 = scalar_select %p32, %s34, %s18
    %p36 = scmp.ge.s32.totalorder %s35, 1
    %s37 = scalar_select %p36, 0, %s35
    %s38 = sadd.s32 %s19, %s20
    %s39 = sadd.s32 %s33, %s29
    %s40 = ssub.s32 %s38, %s39
    %s41 = ssub.s32 %s18, %s37
    %s42 = sor.u32 %s40, %s41
    %p43 = scmp.eq.s32.totalorder %s42, 0
    %s45 = sadd.s32 %s44, 1
    %s46 = scalar_select %p43, %s44, %s45
    %p49 = pneg %p43
    %p50 = scmp.eq.s32.totalorder %s11, 23
    %p51 = por %p49, %p50
    %p52 = scmp.ne.s32.totalorder %s44, %s47
    %p53 = scmp.eq.s32.totalorder %s11, 0
    %p54 = por %p52, %p53
    %p55 = scmp.ne.s32.totalorder %s44, %s47
    %p56 = scmp.eq.s32.totalorder %s16, 23
    %p57 = por %p55, %p56
    %p58 = scmp.ne.s32.totalorder %s47, %s48
    %p59 = scmp.eq.s32.totalorder %s16, 0
    %p60 = por %p58, %p59
    %p61 = scmp.ne.s32.totalorder %s47, %s48
    %p62 = scmp.eq.s32.totalorder %s17, 23
    %p63 = por %p61, %p62
    %p65 = scmp.ne.s32.totalorder %s48, %s64
    %p66 = scmp.eq.s32.totalorder %s17, 0
    %p67 = por %p65, %p66
    %s69 = sadd.s32 %s68, 1
    %p72 = scmp.eq.s32.totalorder %s11, 23
    %p73 = scmp.ne.s32.totalorder %s68, %s70
    %p74 = scmp.eq.s32.totalorder %s11, 0
    %p75 = por %p73, %p74
    %p76 = scmp.ne.s32.totalorder %s68, %s70
    %p77 = scmp.eq.s32.totalorder %s16, 23
    %p78 = por %p76, %p77
    %p79 = scmp.ne.s32.totalorder %s70, %s71
    %p80 = scmp.eq.s32.totalorder %s16, 0
    %p81 = por %p79, %p80
    %p82 = scmp.ne.s32.totalorder %s70, %s71
    %p83 = scmp.eq.s32.totalorder %s17, 23
    %p84 = por %p82, %p83
    %p86 = scmp.ne.s32.totalorder %s71, %s85
    %p87 = scmp.eq.s32.totalorder %s17, 0
    %p88 = por %p86, %p87
    %s90 = sadd.s32 %s89, 1
    %p93 = scmp.eq.s32.totalorder %s11, 23
    %p94 = scmp.ne.s32.totalorder %s89, %s91
    %p95 = scmp.eq.s32.totalorder %s11, 0
    %p96 = por %p94, %p95
    %p97 = scmp.ne.s32.totalorder %s89, %s91
    %p98 = scmp.eq.s32.totalorder %s16, 23
    %p99 = por %p97, %p98
    %p100 = scmp.ne.s32.totalorder %s91, %s92
    %p101 = scmp.eq.s32.totalorder %s16, 0
    %p102 = por %p100, %p101
    %p103 = scmp.ne.s32.totalorder %s91, %s92
    %p104 = scmp.eq.s32.totalorder %s17, 23
    %p105 = por %p103, %p104
    %p107 = scmp.ne.s32.totalorder %s92, %s106
    %p108 = scmp.eq.s32.totalorder %s17, 0
    %p109 = por %p107, %p108
    %s110 = ssub.s32 %s19, %s33
    %s111 = ssub.s32 %s18, %s37
    %s112 = sor.u32 %s110, %s111
    %p113 = scmp.eq.s32.totalorder %s112, 0
    %s115 = sadd.s32 %s114, 1
    %s116 = scalar_select %p113, %s114, %s115
    %p119 = pneg %p113
    %p120 = scmp.eq.s32.totalorder %s11, 23
    %p121 = por %p119, %p120
    %p122 = scmp.ne.s32.totalorder %s114, %s117
    %p123 = scmp.eq.s32.totalorder %s11, 0
    %p124 = por %p122, %p123
    %p125 = scmp.ne.s32.totalorder %s114, %s117
    %p126 = scmp.eq.s32.totalorder %s16, 23
    %p127 = por %p125, %p126
    %p128 = scmp.ne.s32.totalorder %s117, %s118
    %p129 = scmp.eq.s32.totalorder %s16, 0
    %p130 = por %p128, %p129
    %p131 = scmp.ne.s32.totalorder %s117, %s118
    %p132 = scmp.eq.s32.totalorder %s17, 23
    %p133 = por %p131, %p132
    %p135 = scmp.ne.s32.totalorder %s118, %s134
    %p136 = scmp.eq.s32.totalorder %s17, 0
    %p137 = por %p135, %p136
    %s139 = sadd.s32 %s138, 1
    %p142 = scmp.eq.s32.totalorder %s11, 23
    %p143 = scmp.ne.s32.totalorder %s138, %s140
    %p144 = scmp.eq.s32.totalorder %s11, 0
    %p145 = por %p143, %p144
    %p146 = scmp.ne.s32.totalorder %s138, %s140
    %p147 = scmp.eq.s32.totalorder %s16, 23
    %p148 = por %p146, %p147
    %p149 = scmp.ne.s32.totalorder %s140, %s141
    %p150 = scmp.eq.s32.totalorder %s16, 0
    %p151 = por %p149, %p150
    %p152 = scmp.ne.s32.totalorder %s140, %s141
    %p153 = scmp.eq.s32.totalorder %s17, 23
    %p154 = por %p152, %p153
    %p156 = scmp.ne.s32.totalorder %s141, %s155
    %p157 = scmp.eq.s32.totalorder %s17, 0
    %p158 = por %p156, %p157
    %s159 = ssub.s32 %s19, %s33
    %s160 = ssub.s32 %s18, %s37
    %s161 = sor.u32 %s159, %s160
    %p162 = scmp.eq.s32.totalorder %s161, 0
    %s164 = sadd.s32 %s163, 1
    %s165 = scalar_select %p162, %s163, %s164
    %p168 = pneg %p162
    %p169 = scmp.eq.s32.totalorder %s11, 23
    %p170 = por %p168, %p169
    %p171 = scmp.ne.s32.totalorder %s163, %s166
    %p172 = scmp.eq.s32.totalorder %s11, 0
    %p173 = por %p171, %p172
    %p174 = scmp.ne.s32.totalorder %s163, %s166
    %p175 = scmp.eq.s32.totalorder %s16, 23
    %p176 = por %p174, %p175
    %p177 = scmp.ne.s32.totalorder %s166, %s167
    %p178 = scmp.eq.s32.totalorder %s16, 0
    %p179 = por %p177, %p178
    %p180 = scmp.ne.s32.totalorder %s166, %s167
    %p181 = scmp.eq.s32.totalorder %s17, 23
    %p182 = por %p180, %p181
    %p184 = scmp.ne.s32.totalorder %s167, %s183
    %p185 = scmp.eq.s32.totalorder %s17, 0
    %p186 = por %p184, %p185
    %p187 = scmp.le.s32.totalorder 1, %s11
    %p188 = scmp.lt.s32.totalorder %s11, 25
    %p189 = pnand %p187, %p188
    %p190 = pneg %p189
    // Predicated region
    $region9: #{basic_block_forward.3} parent=5 // pred_check
      _
    $region10: #{basic_block_forward.3} parent=5 // pred_check_branch
      %192 = sbr.rel (%p189) target = $region12
    $region11: #{basic_block_forward.3} parent=5 // pred_region
      %s193 = ssub.s32 %s11, 1
      // Predicated region
      $region13: #{basic_block_forward.3} parent=11 // pred_check
        %p194 = pneg %p81
      $region14: #{basic_block_forward.3} parent=11 // pred_check_branch
        %196 = sbr.rel (%p194) target = $region16
      $region15: #{basic_block_forward.3} parent=11 // pred_region
        _
      $region16: #{basic_block_forward.3} parent=11 // pred_fallthru
        _
      // Predicated region
      $region17: #{basic_block_forward.3} parent=11 // pred_check
        %p197 = pneg %p102
      $region18: #{basic_block_forward.3} parent=11 // pred_check_branch
        %199 = sbr.rel (%p197) target = $region20
      $region19: #{basic_block_forward.3} parent=11 // pred_region
        _
      $region20: #{basic_block_forward.3} parent=11 // pred_fallthru
        _
      // Predicated region
      $region21: #{basic_block_forward.3} parent=11 // pred_check
        %p200 = pneg %p151
      $region22: #{basic_block_forward.3} parent=11 // pred_check_branch
        %202 = sbr.rel (%p200) target = $region24
      $region23: #{basic_block_forward.3} parent=11 // pred_region
        _
      $region24: #{basic_block_forward.3} parent=11 // pred_fallthru
        _
    $region12: #{basic_block_forward.3} parent=5 // pred_fallthru
      _
    %p203 = scmp.lt.s32.totalorder %s11, 24
    // Predicated region
    $region25: #{basic_block_forward.3} parent=5 // pred_check
      %p204 = pneg %p203
    $region26: #{basic_block_forward.3} parent=5 // pred_check_branch
      %206 = sbr.rel (%p204) target = $region28
    $region27: #{basic_block_forward.3} parent=5 // pred_region
      // Predicated region
      $region29: #{basic_block_forward.3} parent=27 // pred_check
        %p207 = pneg %p54
      $region30: #{basic_block_forward.3} parent=27 // pred_check_branch
        %209 = sbr.rel (%p207) target = $region32
      $region31: #{basic_block_forward.3} parent=27 // pred_region
        %s210 = sadd.s32 %s19, %s20
        %s211 = smul.u32 2, %s18
        %p212 = scmp.lt.s32.totalorder %s210, 9
        %s213 = scalar_select %p212, %s210, 9
        %p214 = scmp.lt.s32.totalorder %s211, 1
        %s215 = scalar_select %p214, %s211, 1
        %s216 = smul.addr %s215, 3
        %s217 = smul.addr %s213, 6
        %s218 = sadd.s32 %s216, %s217
        %s219 = smul.addr %s218, 4
        %s220 = scalar_lea.vmem %s0, %s219
        %s221 = sadd.s32 %s19, %s20
        %s222 = smul.u32 2, %s18
      $region32: #{basic_block_forward.3} parent=27 // pred_fallthru
        _
      // Predicated region
      $region33: #{basic_block_forward.3} parent=27 // pred_check
        %p223 = pneg %p124
      $region34: #{basic_block_forward.3} parent=27 // pred_check_branch
        %225 = sbr.rel (%p223) target = $region36
      $region35: #{basic_block_forward.3} parent=27 // pred_region
        %s226 = smul.u32 2, %s18
        %p227 = scmp.lt.s32.totalorder %s19, 7
        %s228 = scalar_select %p227, %s19, 7
        %p229 = scmp.lt.s32.totalorder %s226, 1
        %s230 = scalar_select %p229, %s226, 1
        %s231 = smul.addr %s228, 2
        %s232 = sadd.s32 %s230, %s231
        %s233 = smul.addr %s232, 4
        %s234 = scalar_lea.vmem %s3, %s233
        %s235 = smul.u32 2, %s18
      $region36: #{basic_block_forward.3} parent=27 // pred_fallthru
        _
    $region28: #{basic_block_forward.3} parent=5 // pred_fallthru
      _
    %p236 = scmp.le.s32.totalorder 1, %s11
    %p237 = scmp.lt.s32.totalorder %s11, 25
    %p238 = pnand %p236, %p237
    %p239 = pneg %p238
    // Predicated region
    $region37: #{basic_block_forward.3} parent=5 // pred_check
      _
    $region38: #{basic_block_forward.3} parent=5 // pred_check_branch
      %241 = sbr.rel (%p238) target = $region40
    $region39: #{basic_block_forward.3} parent=5 // pred_region
      %s242 = ssub.s32 %s11, 1
      %s243 = sadd.s32 %s22, %s23
      %s244 = smul.u32 2, %s21
      %p245 = scmp.lt.s32.totalorder %s243, 9
      %s246 = scalar_select %p245, %s243, 9
      %p247 = scmp.lt.s32.totalorder %s244, 1
      %s248 = scalar_select %p247, %s244, 1
      %s249 = smul.addr %s248, 3
      %s250 = smul.addr %s246, 6
      %s251 = sadd.s32 %s249, %s250
      %s252 = smul.addr %s251, 4
      %s253 = scalar_lea.vmem %s0, %s252
      %p254 = pneg %p60
      %p255 = pneg %p57
      %p256 = pneg %p81
      %p257 = pneg %p78
      %p258 = pneg %p102
      %p259 = pneg %p99
      %s260 = smul.u32 2, %s21
      %p261 = scmp.lt.s32.totalorder %s22, 7
      %s262 = scalar_select %p261, %s22, 7
      %p263 = scmp.lt.s32.totalorder %s260, 1
      %s264 = scalar_select %p263, %s260, 1
      %s265 = smul.addr %s262, 2
      %s266 = sadd.s32 %s264, %s265
      %s267 = smul.addr %s266, 4
      %s268 = scalar_lea.vmem %s3, %s267
      %p269 = pneg %p130
      %p270 = pneg %p127
      %p271 = pneg %p151
      %p272 = pneg %p148
      %p273 = pneg %p179
      %p274 = pneg %p176
      %s275 = smul.u32 2, %s21
      %p276 = scmp.lt.s32.totalorder %s22, 7
      %s277 = scalar_select %p276, %s22, 7
      %p278 = scmp.lt.s32.totalorder %s275, 1
      %s279 = scalar_select %p278, %s275, 1
      %s280 = smul.addr %s277, 2
      %s281 = sadd.s32 %s279, %s280
      %s282 = smul.addr %s281, 8
      %s283 = scalar_lea.vmem %s5, %s282
      %s284 = sadd.s32 %s22, %s23
      %s285 = smul.u32 2, %s21
      %p286 = scmp.lt.s32.totalorder %s284, 9
      %s287 = scalar_select %p286, %s284, 9
      %p288 = scmp.lt.s32.totalorder %s285, 1
      %s289 = scalar_select %p288, %s285, 1
      %s290 = smul.addr %s289, 3
      %s291 = smul.addr %s287, 6
      %s292 = sadd.s32 %s290, %s291
      %s293 = smul.addr %s292, 4
      %s294 = scalar_lea.vmem %s0, %s293
      %s295 = sadd.s32 %s22, %s23
      %s296 = smul.u32 2, %s21
      %s297 = smul.u32 2, %s21
      %p298 = scmp.lt.s32.totalorder %s22, 7
      %s299 = scalar_select %p298, %s22, 7
      %p300 = scmp.lt.s32.totalorder %s297, 1
      %s301 = scalar_select %p300, %s297, 1
      %s302 = smul.addr %s299, 2
      %s303 = sadd.s32 %s301, %s302
      %s304 = smul.addr %s303, 4
      %s305 = scalar_lea.vmem %s3, %s304
      %s306 = smul.u32 2, %s21
      %s307 = smul.u32 2, %s21
      %p308 = scmp.lt.s32.totalorder %s22, 7
      %s309 = scalar_select %p308, %s22, 7
      %p310 = scmp.lt.s32.totalorder %s307, 1
      %s311 = scalar_select %p310, %s307, 1
      %s312 = smul.addr %s309, 2
      %s313 = sadd.s32 %s311, %s312
      %s314 = smul.addr %s313, 8
      %s315 = scalar_lea.vmem %s5, %s314
      %s316 = smul.u32 2, %s21
      %p318 = scmp.eq.s32.totalorder %s23, 0
      // Predicated region
      $region41: #{basic_block_forward.3} parent=39 // pred_check
        %p319 = pneg %p318
      $region42: #{basic_block_forward.3} parent=39 // pred_check_branch
        %321 = sbr.rel (%p319) target = $region44
      $region43: #{basic_block_forward.3} parent=39 // pred_region
        %v322 = vld [vmem:[%s305] sm:$0xf]
        %v323 = vld [vmem:[%s305 + $0x4] sm:$0xf]
        %v324 = vld [vmem:[%s4] sm:$0xf]
        %v327 = vunpack.c.l.b16 %v322
        %v328 = vunpack.c.l.b16 %v323
        %v329 = vpack.c.b16 %v328, %v327
        %vm330 = vcmask 64512
        %v332 = vsel %vm330, %v329, 0
        %vm334 = vcmask 1043456
        %v336 = vsel %vm334, %v324, 0
        %338 = vmatprep.subr.bf16.mxu0 0
        %339 = vmatpush1.bf16.msra.mxu0 %v336
        %340 = vmatprep.subr.bf16.mxu0 0
        %341 = vmatpush1.bf16.msra.mxu0 0
        %342 = vmatprep.subr.bf16.mxu0 0
        %343 = vmatpush1.bf16.msra.mxu0 0
        %344 = vmatprep.subr.bf16.mxu0 0
        %345 = vmatpush1.bf16.msra.mxu0 0
        %346 = vmatprep.subr.bf16.mxu0 0
        %347 = vmatpush1.bf16.msra.mxu0 0
        %348 = vmatprep.subr.bf16.mxu0 0
        %349 = vmatpush1.bf16.msra.mxu0 0
        %350 = vmatprep.subr.bf16.mxu0 0
        %351 = vmatpush1.bf16.msra.mxu0 0
        %352 = vmatprep.subr.bf16.mxu0 0
        %353 = vmatpush1.bf16.msra.mxu0 0
        %354 = vmatprep.subr.bf16.mxu0 0
        %355 = vmatpush1.bf16.msra.mxu0 0
        %356 = vmatprep.subr.bf16.mxu0 0
        %357 = vmatpush1.bf16.msra.mxu0 0
        %358 = vmatprep.subr.bf16.mxu0 0
        %359 = vmatpush1.bf16.msra.mxu0 0
        %360 = vmatprep.subr.bf16.mxu0 0
        %361 = vmatpush1.bf16.msra.mxu0 0
        %362 = vmatprep.subr.bf16.mxu0 0
        %363 = vmatpush1.bf16.msra.mxu0 0
        %364 = vmatprep.subr.bf16.mxu0 0
        %365 = vmatpush1.bf16.msra.mxu0 0
        %366 = vmatprep.subr.bf16.mxu0 0
        %367 = vmatpush1.bf16.msra.mxu0 0
        %368 = vmatprep.subr.bf16.mxu0 0
        %369 = vmatpush1.bf16.msra.mxu0 0
        %370 = vmatprep.mubr.bf16.mxu0 0
        %371 = vmatmul.mubr.bf16.gmra.mrb[0].mxu0 %v332
        %v372 = vpop.f32.mrb[0].mxu0
        %v373 = vadd.f32 0.0, %v372
        %v374 = vpop.f32.mrb[0].mxu0
        %v375 = vpop.f32.mrb[0].mxu0
        %v376 = vadd.f32 0.0, %v375
        %v377 = vpop.f32.mrb[0].mxu0
        %378 = vdwg.mxu0
        %379 = vst [vmem:[#allocation2] sm:$0xff] %v373
        %380 = vst [vmem:[#allocation2 + $0x8] sm:$0xff] %v376
      $region44: #{basic_block_forward.3} parent=39 // pred_fallthru
        _
      %v381 = vld [vmem:[#allocation2] sm:$0xff]
      %v382 = vld [vmem:[#allocation2 + $0x8] sm:$0xff]
      %v383 = vld [vmem:[%s294] sm:$0xff]
      %v384 = vld [vmem:[%s294 + $0x8] sm:$0xf]
      %v385 = vld [vmem:[%s294 + $0xc] sm:$0xff]
      %v386 = vld [vmem:[%s294 + $0x14] sm:$0xf]
      %s387 = smul.u32 %s23, 48
      %s388 = smul.addr %s387, 4
      %s389 = scalar_lea.vmem %s1, %s388
      %v390 = vld [vmem:[%s389] sm:$0xf]
      %v391 = vld [vmem:[%s389 + $0x4] sm:$0xf]
      %v392 = vld [vmem:[%s389 + $0x8] sm:$0xf]
      %v393 = vld [vmem:[%s389 + $0xc] sm:$0xf]
      %v394 = vld [vmem:[%s389 + $0x10] sm:$0xf]
      %v395 = vld [vmem:[%s389 + $0x14] sm:$0xf]
      %v396 = vld [vmem:[%s389 + $0x18] sm:$0xf]
      %v397 = vld [vmem:[%s389 + $0x1c] sm:$0xf]
      %v398 = vld [vmem:[%s389 + $0x20] sm:$0xf]
      %v399 = vld [vmem:[%s389 + $0x24] sm:$0xf]
      %v400 = vld [vmem:[%s389 + $0x28] sm:$0xf]
      %v401 = vld [vmem:[%s389 + $0x2c] sm:$0xf]
      %v402 = vld [vmem:[%s389 + $0x30] sm:$0xf]
      %v403 = vld [vmem:[%s389 + $0x34] sm:$0xf]
      %v404 = vld [vmem:[%s389 + $0x38] sm:$0xf]
      %v405 = vld [vmem:[%s389 + $0x3c] sm:$0xf]
      %v406 = vld [vmem:[%s389 + $0x40] sm:$0xf]
      %v407 = vld [vmem:[%s389 + $0x44] sm:$0xf]
      %v408 = vld [vmem:[%s389 + $0x48] sm:$0xf]
      %v409 = vld [vmem:[%s389 + $0x4c] sm:$0xf]
      %v410 = vld [vmem:[%s389 + $0x50] sm:$0xf]
      %v411 = vld [vmem:[%s389 + $0x54] sm:$0xf]
      %v412 = vld [vmem:[%s389 + $0x58] sm:$0xf]
      %v413 = vld [vmem:[%s389 + $0x5c] sm:$0xf]
      %v414 = vld [vmem:[%s389 + $0x60] sm:$0xf]
      %v415 = vld [vmem:[%s389 + $0x64] sm:$0xf]
      %v416 = vld [vmem:[%s389 + $0x68] sm:$0xf]
      %v417 = vld [vmem:[%s389 + $0x6c] sm:$0xf]
      %v418 = vld [vmem:[%s389 + $0x70] sm:$0xf]
      %v419 = vld [vmem:[%s389 + $0x74] sm:$0xf]
      %v420 = vld [vmem:[%s389 + $0x78] sm:$0xf]
      %v421 = vld [vmem:[%s389 + $0x7c] sm:$0xf]
      %v422 = vld [vmem:[%s389 + $0x80] sm:$0xf]
      %v423 = vld [vmem:[%s389 + $0x84] sm:$0xf]
      %v424 = vld [vmem:[%s389 + $0x88] sm:$0xf]
      %v425 = vld [vmem:[%s389 + $0x8c] sm:$0xf]
      %v426 = vld [vmem:[%s389 + $0x90] sm:$0xf]
      %v427 = vld [vmem:[%s389 + $0x94] sm:$0xf]
      %v428 = vld [vmem:[%s389 + $0x98] sm:$0xf]
      %v429 = vld [vmem:[%s389 + $0x9c] sm:$0xf]
      %v430 = vld [vmem:[%s389 + $0xa0] sm:$0xf]
      %v431 = vld [vmem:[%s389 + $0xa4] sm:$0xf]
      %v432 = vld [vmem:[%s389 + $0xa8] sm:$0xf]
      %v433 = vld [vmem:[%s389 + $0xac] sm:$0xf]
      %v434 = vld [vmem:[%s389 + $0xb0] sm:$0xf]
      %v435 = vld [vmem:[%s389 + $0xb4] sm:$0xf]
      %v436 = vld [vmem:[%s389 + $0xb8] sm:$0xf]
      %v437 = vld [vmem:[%s389 + $0xbc] sm:$0xf]
      %v442 = vunpack.c.l.b16 %v383
      %v443 = vunpack.c.h.b16 %v383
      %v444 = vunpack.c.l.b16 %v384
      %v445 = vunpack.c.l.b16 %v385
      %v446 = vunpack.c.h.b16 %v385
      %v447 = vunpack.c.l.b16 %v386
      %v448 = vpack.c.b16 %v445, %v442
      %v449 = vpack.c.b16 %v446, %v443
      %v450 = vpack.c.b16 %v447, %v444
      %v502 = vunpack.c.l.b16 %v390
      %v503 = vunpack.c.l.b16 %v391
      %v504 = vunpack.c.l.b16 %v392
      %v505 = vunpack.c.l.b16 %v393
      %v506 = vunpack.c.l.b16 %v394
      %v507 = vunpack.c.l.b16 %v395
      %v508 = vunpack.c.l.b16 %v396
      %v509 = vunpack.c.l.b16 %v397
      %v510 = vunpack.c.l.b16 %v398
      %v511 = vunpack.c.l.b16 %v399
      %v512 = vunpack.c.l.b16 %v400
      %v513 = vunpack.c.l.b16 %v401
      %v514 = vunpack.c.l.b16 %v402
      %v515 = vunpack.c.l.b16 %v403
      %v516 = vunpack.c.l.b16 %v404
      %v517 = vunpack.c.l.b16 %v405
      %v518 = vunpack.c.l.b16 %v406
      %v519 = vunpack.c.l.b16 %v407
      %v520 = vunpack.c.l.b16 %v408
      %v521 = vunpack.c.l.b16 %v409
      %v522 = vunpack.c.l.b16 %v410
      %v523 = vunpack.c.l.b16 %v411
      %v524 = vunpack.c.l.b16 %v412
      %v525 = vunpack.c.l.b16 %v413
      %v526 = vunpack.c.l.b16 %v414
      %v527 = vunpack.c.l.b16 %v415
      %v528 = vunpack.c.l.b16 %v416
      %v529 = vunpack.c.l.b16 %v417
      %v530 = vunpack.c.l.b16 %v418
      %v531 = vunpack.c.l.b16 %v419
      %v532 = vunpack.c.l.b16 %v420
      %v533 = vunpack.c.l.b16 %v421
      %v534 = vunpack.c.l.b16 %v422
      %v535 = vunpack.c.l.b16 %v423
      %v536 = vunpack.c.l.b16 %v424
      %v537 = vunpack.c.l.b16 %v425
      %v538 = vunpack.c.l.b16 %v426
      %v539 = vunpack.c.l.b16 %v427
      %v540 = vunpack.c.l.b16 %v428
      %v541 = vunpack.c.l.b16 %v429
      %v542 = vunpack.c.l.b16 %v430
      %v543 = vunpack.c.l.b16 %v431
      %v544 = vunpack.c.l.b16 %v432
      %v545 = vunpack.c.l.b16 %v433
      %v546 = vunpack.c.l.b16 %v434
      %v547 = vunpack.c.l.b16 %v435
      %v548 = vunpack.c.l.b16 %v436
      %v549 = vunpack.c.l.b16 %v437
      %v550 = vpack.c.b16 %v503, %v502
      %v551 = vpack.c.b16 %v505, %v504
      %v552 = vpack.c.b16 %v507, %v506
      %v553 = vpack.c.b16 %v509, %v508
      %v554 = vpack.c.b16 %v511, %v510
      %v555 = vpack.c.b16 %v513, %v512
      %v556 = vpack.c.b16 %v515, %v514
      %v557 = vpack.c.b16 %v517, %v516
      %v558 = vpack.c.b16 %v519, %v518
      %v559 = vpack.c.b16 %v521, %v520
      %v560 = vpack.c.b16 %v523, %v522
      %v561 = vpack.c.b16 %v525, %v524
      %v562 = vpack.c.b16 %v527, %v526
      %v563 = vpack.c.b16 %v529, %v528
      %v564 = vpack.c.b16 %v531, %v530
      %v565 = vpack.c.b16 %v533, %v532
      %v566 = vpack.c.b16 %v535, %v534
      %v567 = vpack.c.b16 %v537, %v536
      %v568 = vpack.c.b16 %v539, %v538
      %v569 = vpack.c.b16 %v541, %v540
      %v570 = vpack.c.b16 %v543, %v542
      %v571 = vpack.c.b16 %v545, %v544
      %v572 = vpack.c.b16 %v547, %v546
      %v573 = vpack.c.b16 %v549, %v548
      %598 = vmatprep.subr.bf16.mxu0 0
      %599 = vmatpush1.bf16.msra.mxu0 %v550
      %600 = vmatprep.subr.bf16.mxu0 0
      %601 = vmatpush1.bf16.msra.mxu0 %v551
      %602 = vmatprep.subr.bf16.mxu0 0
      %603 = vmatpush1.bf16.msra.mxu0 %v552
      %604 = vmatprep.subr.bf16.mxu0 0
      %605 = vmatpush1.bf16.msra.mxu0 %v553
      %606 = vmatprep.subr.bf16.mxu0 0
      %607 = vmatpush1.bf16.msra.mxu0 %v554
      %608 = vmatprep.subr.bf16.mxu0 0
      %609 = vmatpush1.bf16.msra.mxu0 %v555
      %610 = vmatprep.subr.bf16.mxu0 0
      %611 = vmatpush1.bf16.msra.mxu0 %v556
      %612 = vmatprep.subr.bf16.mxu0 0
      %613 = vmatpush1.bf16.msra.mxu0 %v557
      %614 = vmatprep.subr.bf16.mxu0 0
      %615 = vmatpush1.bf16.msra.mxu0 %v558
      %616 = vmatprep.subr.bf16.mxu0 0
      %617 = vmatpush1.bf16.msra.mxu0 %v559
      %618 = vmatprep.subr.bf16.mxu0 0
      %619 = vmatpush1.bf16.msra.mxu0 %v560
      %620 = vmatprep.subr.bf16.mxu0 0
      %621 = vmatpush1.bf16.msra.mxu0 %v561
      %622 = vmatprep.subr.bf16.mxu0 0
      %623 = vmatpush1.bf16.msra.mxu0 %v562
      %624 = vmatprep.subr.bf16.mxu0 0
      %625 = vmatpush1.bf16.msra.mxu0 %v563
      %626 = vmatprep.subr.bf16.mxu0 0
      %627 = vmatpush1.bf16.msra.mxu0 %v564
      %628 = vmatprep.subr.bf16.mxu0 0
      %629 = vmatpush1.bf16.msra.mxu0 %v565
      %630 = vmatprep.mubr.bf16.mxu0 %v449
      %631 = vmatmul.mubr.bf16.gmra.mrb[0].mxu0 %v448
      %v632 = vpop.f32.mrb[0].mxu0
      %v633 = vadd.f32 0.0, %v632
      %v634 = vpop.f32.mrb[0].mxu0
      %v635 = vpop.f32.mrb[0].mxu0
      %v636 = vadd.f32 0.0, %v635
      %v637 = vpop.f32.mrb[0].mxu0
      %638 = vdwg.mxu0
      %639 = vmatprep.subr.bf16.mxu0 0
      %640 = vmatpush1.bf16.msra.mxu0 %v566
      %641 = vmatprep.subr.bf16.mxu0 0
      %642 = vmatpush1.bf16.msra.mxu0 %v567
      %643 = vmatprep.subr.bf16.mxu0 0
      %644 = vmatpush1.bf16.msra.mxu0 %v568
      %645 = vmatprep.subr.bf16.mxu0 0
      %646 = vmatpush1.bf16.msra.mxu0 %v569
      %647 = vmatprep.subr.bf16.mxu0 0
      %648 = vmatpush1.bf16.msra.mxu0 %v570
      %649 = vmatprep.subr.bf16.mxu0 0
      %650 = vmatpush1.bf16.msra.mxu0 %v571
      %651 = vmatprep.subr.bf16.mxu0 0
      %652 = vmatpush1.bf16.msra.mxu0 %v572
      %653 = vmatprep.subr.bf16.mxu0 0
      %654 = vmatpush1.bf16.msra.mxu0 %v573
      %655 = vmatprep.subr.bf16.mxu0 0
      %656 = vmatpush1.bf16.msra.mxu0 0
      %657 = vmatprep.subr.bf16.mxu0 0
      %658 = vmatpush1.bf16.msra.mxu0 0
      %659 = vmatprep.subr.bf16.mxu0 0
      %660 = vmatpush1.bf16.msra.mxu0 0
      %661 = vmatprep.subr.bf16.mxu0 0
      %662 = vmatpush1.bf16.msra.mxu0 0
      %663 = vmatprep.subr.bf16.mxu0 0
      %664 = vmatpush1.bf16.msra.mxu0 0
      %665 = vmatprep.subr.bf16.mxu0 0
      %666 = vmatpush1.bf16.msra.mxu0 0
      %667 = vmatprep.subr.bf16.mxu0 0
      %668 = vmatpush1.bf16.msra.mxu0 0
      %669 = vmatprep.subr.bf16.mxu0 0
      %670 = vmatpush1.bf16.msra.mxu0 0
      %671 = vmatprep.mubr.bf16.mxu0 0
      %672 = vmatmul.mubr.bf16.gmra.mrb[0].mxu0 %v450
      %v673 = vpop.f32.mrb[0].mxu0
      %v674 = vadd.f32 %v633, %v673
      %v675 = vpop.f32.mrb[0].mxu0
      %v676 = vpop.f32.mrb[0].mxu0
      %v677 = vadd.f32 %v636, %v676
      %v678 = vpop.f32.mrb[0].mxu0
      %679 = vdwg.mxu0
      %v680 = vadd.f32 %v381, %v674
      %v681 = vadd.f32 %v382, %v677
      %682 = vst [vmem:[#allocation2] sm:$0xff] %v680
      %683 = vst [vmem:[#allocation2 + $0x8] sm:$0xff] %v681
      %p684 = scmp.eq.s32.totalorder %s23, 2
      // Predicated region
      $region45: #{basic_block_forward.3} parent=39 // pred_check
        %p685 = pneg %p684
      $region46: #{basic_block_forward.3} parent=39 // pred_check_branch
        %687 = sbr.rel (%p685) target = $region48
      $region47: #{basic_block_forward.3} parent=39 // pred_region
        %v688 = vld [vmem:[#allocation2] sm:$0xff]
        %v689 = vld [vmem:[#allocation2 + $0x8] sm:$0xff]
        %v690 = vld [vmem:[%s2] sm:$0x1]
        %v692 = vlaneseq
        %v693 = vshrl.u32 %v692, 7
        %v694 = vsub.s32 0, %v693
        %v695 = vrot.slane %v690, %v694
        %v697 = vadd.f32 %v688, %v695
        %v698 = vadd.f32 %v689, %v695
        %v699 = vmax.f32 %v697, 0.0
        %v700 = vmax.f32 %v698, 0.0
        %701 = vst [vmem:[%s315] sm:$0xff] %v699
        %702 = vst [vmem:[%s315 + $0x8] sm:$0xff] %v700
      $region48: #{basic_block_forward.3} parent=39 // pred_fallthru
        _
      %s703 = smul.u32 2, %s21
      %p704 = scmp.lt.s32.totalorder %s22, 7
      %s705 = scalar_select %p704, %s22, 7
      %p706 = scmp.lt.s32.totalorder %s703, 1
      %s707 = scalar_select %p706, %s703, 1
      %s708 = smul.addr %s705, 2
      %s709 = sadd.s32 %s707, %s708
      %s710 = smul.addr %s709, 8
      %s711 = scalar_lea.vmem %s5, %s710
      // Predicated region
      $region49: #{basic_block_forward.3} parent=39 // pred_check
        %p712 = pneg %p176
      $region50: #{basic_block_forward.3} parent=39 // pred_check_branch
        %714 = sbr.rel (%p712) target = $region52
      $region51: #{basic_block_forward.3} parent=39 // pred_region
        %s715 = smul.u32 2, %s21
      $region52: #{basic_block_forward.3} parent=39 // pred_fallthru
        _
    $region40: #{basic_block_forward.3} parent=5 // pred_fallthru
      _
    %p716 = scmp.le.s32.totalorder 2, %s11
    // Predicated region
    $region53: #{basic_block_forward.3} parent=5 // pred_check
      %p717 = pneg %p716
    $region54: #{basic_block_forward.3} parent=5 // pred_check_branch
      %719 = sbr.rel (%p717) target = $region56
    $region55: #{basic_block_forward.3} parent=5 // pred_region
      %s720 = ssub.s32 %s11, 2
      // Predicated region
      $region57: #{basic_block_forward.3} parent=55 // pred_check
        %p721 = pneg %p182
      $region58: #{basic_block_forward.3} parent=55 // pred_check_branch
        %723 = sbr.rel (%p721) target = $region60
      $region59: #{basic_block_forward.3} parent=55 // pred_region
        %s724 = smul.u32 2, %s24
        %p725 = scmp.lt.s32.totalorder %s25, 7
        %s726 = scalar_select %p725, %s25, 7
        %p727 = scmp.lt.s32.totalorder %s724, 1
        %s728 = scalar_select %p727, %s724, 1
        %s729 = smul.addr %s726, 2
        %s730 = sadd.s32 %s728, %s729
        %s731 = smul.addr %s730, 8
        %s732 = scalar_lea.vmem %s5, %s731
      $region60: #{basic_block_forward.3} parent=55 // pred_fallthru
        _
    $region56: #{basic_block_forward.3} parent=5 // pred_fallthru
      _
  $region6: #{basic_block_forward.3} parent=0 // loop_footer
    %s15 = sadd.s32 1, %s11
  $region7: #{basic_block_forward.3} parent=0 // loop_footer_branch
    %10 = sbr.rel target = $region3
  $region8: #{basic_block_forward.3} parent=0 // loop_exit
    _

</llo_original>
